<compile_context>
chip_gen: v5e
topology: v5e:2x2
jax: 0.10.0
libtpu: 0.0.40
codegen_flags: <defaults>
</compile_context>

<pallas_src>
import functools

import jax
import jax.numpy as jnp
import numpy as np
from jax.experimental import pallas as pl
from jax.experimental.pallas import tpu as pltpu

LANE = 128
SUB = 8


def _tpu_generation_params():
    """(num_tensorcores, max_tile_rows, vmem_limit_bytes) for this chip."""
    try:
        kind = getattr(jax.devices()[0], "device_kind", "").lower()
    except Exception:  # pragma: no cover - defensive
        kind = ""
    if "v7" in kind:
        # v7x: 2 TensorCores / chip, 64 MiB physical VMEM per TC.
        # 4096 rows -> 2 MiB per f32 input block; 2 in x 2 bufs = 8 MiB of
        # pipeline buffers plus elementwise temporaries stays well under 32 MiB.
        return 2, 4096, 32 * 1024 * 1024
    # v5e / v6e: 1 TensorCore, 128 MiB physical VMEM -> a 64 MiB scoped limit
    # is safe; 8192 rows -> 4 MiB per f32 input block (16 MiB pipelined).
    return 1, 8192, 64 * 1024 * 1024


def _corr_moments_kernel(yhat_ref, y_ref, out_ref, *,
                         n_valid, tile_rows, tiles_per_core, tiles_total,
                         use_mxu_reduce):
    c = pl.program_id(0)          # core-split axis ("parallel")
    i = pl.program_id(1)          # reduction axis over row tiles ("arbitrary")

    # Output block index is constant across i -> the (6, 8, 128) block stays
    # VMEM-resident; accumulate directly into it (no scratch, no finalize).
    @pl.when(i == 0)
    def _init():
        out_ref[...] = jnp.zeros_like(out_ref)

    tile_elems = tile_rows * LANE
    logical_tile = c * tiles_per_core + i          # unclamped logical index
    tile_start = logical_tile * tile_elems
    is_real = logical_tile < tiles_total           # phantom tiles skip work
    # Only the last real tile can contain zero-padded slots or the stale tail
    # of a partial edge-block DMA.
    is_full = tile_start + tile_elems <= n_valid

    def accumulate(extra_mask):
        # Ordered to keep VMEM liveness of the big temporaries low.
        x = yhat_ref[...].astype(jnp.float32)
        y = y_ref[...].astype(jnp.float32)
        valid = jnp.logical_not(jnp.isnan(y))
        if extra_mask is not None:                 # tail tile only
            valid = jnp.logical_and(valid, extra_mask)
        cm = valid.astype(jnp.float32)
        xm = jnp.where(valid, x, 0.0)
        ym = jnp.where(valid, y, 0.0)
        moments = (cm, xm, ym, xm * ym, xm * xm, ym * ym)
        if use_mxu_reduce:
            # Column-sum on the MXU (vector-extended slot) instead of six VPU
            # add chains; every sublane row of the result holds the identical
            # full column sum (corrected for in the wrapper epilogue).
            ones = jnp.ones((SUB, tile_rows), dtype=jnp.float32)
            for k, q in enumerate(moments):
                out_ref[k] += jnp.dot(ones, q,
                                      preferred_element_type=jnp.float32)
        else:
            # Small / ragged tiles: vreg-wise VPU reduction over sublane groups.
            for k, q in enumerate(moments):
                out_ref[k] += jnp.sum(
                    q.reshape(tile_rows // SUB, SUB, LANE), axis=0)

    # Interior tiles: NaN mask only (no per-element index math on the hot path).
    @pl.when(jnp.logical_and(is_real, is_full))
    def _interior():
        accumulate(None)

    # Tail tile: additionally mask slots past the true element count.  This
    # covers both the zero-padded region (padded y is 0.0, i.e. *not* NaN) and
    # the stale tail of the VMEM buffer left by a partial edge-block DMA.
    @pl.when(jnp.logical_and(is_real, jnp.logical_not(is_full)))
    def _tail():
        row_ids = jax.lax.broadcasted_iota(jnp.int32, (tile_rows, LANE), 0)
        lane_ids = jax.lax.broadcasted_iota(jnp.int32, (tile_rows, LANE), 1)
        local_idx = row_ids * LANE + lane_ids
        # Note: assumes n_valid < 2**31 (int32 scalar math).
        accumulate(local_idx < (n_valid - tile_start))


def corr_loss(yhat: jax.Array, y: jax.Array) -> jax.Array:
    """Pearson correlation of yhat vs y, ignoring positions where y is NaN."""
    ncores_hw, max_tile_rows, vmem_limit = _tpu_generation_params()

    # Layout plumbing (free bitcasts for standard row-major inputs).
    yhat_f = jnp.ravel(yhat)
    y_f = jnp.ravel(y)
    n = yhat_f.shape[0]

    pad = (-n) % (SUB * LANE)
    if pad:
        # Only for ragged flat lengths; padded slots are masked out in-kernel
        # by the global element index, so the pad values are irrelevant.
        yhat_f = jnp.pad(yhat_f, (0, pad))
        y_f = jnp.pad(y_f, (0, pad))
    rows = (n + pad) // LANE                        # multiple of 8

    tile_rows = min(max_tile_rows, rows)            # multiple of 8, <= rows
    tiles_total = (rows + tile_rows - 1) // tile_rows
    ncores = min(ncores_hw, tiles_total)            # never more cores than tiles
    tiles_per_core = (tiles_total + ncores - 1) // ncores

    # MXU column-sum reduction needs a contraction dim that's a multiple of
    # 128; tiny/ragged inputs fall back to the VPU reshape-sum path.
    use_mxu_reduce = (tile_rows % LANE == 0)

    yhat_2d = yhat_f.reshape(rows, LANE)
    y_2d = y_f.reshape(rows, LANE)

    def in_map(c, i):
        # Clamp phantom tiles (only possible when ncores == 2 and tiles_total
        # is odd) onto the last real tile: the DMA stays in bounds and the
        # kernel skips their accumulation via the unclamped logical index.
        return (jnp.minimum(c * tiles_per_core + i, tiles_total - 1), 0)

    kernel = functools.partial(
        _corr_moments_kernel,
        n_valid=n, tile_rows=tile_rows, tiles_per_core=tiles_per_core,
        tiles_total=tiles_total, use_mxu_reduce=use_mxu_reduce)

    in_bytes = rows * LANE * (jnp.dtype(yhat_f.dtype).itemsize
                              + jnp.dtype(y_f.dtype).itemsize)
    elem_flops = 10 + (2 * SUB * 6 if use_mxu_reduce else 6)
    cost = pl.CostEstimate(
        flops=rows * LANE * elem_flops,
        transcendentals=0,
        bytes_accessed=in_bytes + ncores * 6 * SUB * LANE * 4)

    partials = pl.pallas_call(
        kernel,
        out_shape=jax.ShapeDtypeStruct((ncores, 6, SUB, LANE), jnp.float32),
        grid=(ncores, tiles_per_core),
        in_specs=[
            pl.BlockSpec((tile_rows, LANE), in_map),
            pl.BlockSpec((tile_rows, LANE), in_map),
        ],
        out_specs=pl.BlockSpec((None, 6, SUB, LANE), lambda c, i: (c, 0, 0, 0)),
        compiler_params=pltpu.CompilerParams(
            dimension_semantics=("parallel", "arbitrary"),
            vmem_limit_bytes=vmem_limit),
        cost_estimate=cost,
    )(yhat_2d, y_2d)

    # Tiny epilogue over the (ncores, 6, 8, 128) partial moments.
    if use_mxu_reduce:
        # MXU path duplicates the full column sum across all 8 sublane rows of
        # each accumulator -> read a single row.
        m = jnp.sum(partials[:, :, 0, :], axis=(0, 2))      # (6,)
    else:
        m = jnp.sum(partials, axis=(0, 2, 3))                # (6,)

    cnt, sx, sy, sxy, sxx, syy = m[0], m[1], m[2], m[3], m[4], m[5]
    # Bessel (n-1) factors cancel in r = cov / (std_x * std_y).
    sxy_c = sxy - sx * sy / cnt
    sxx_c = sxx - sx * sx / cnt
    syy_c = syy - sy * sy / cnt
    # cnt == 0 or 1 (all-NaN / single valid element) yields NaN/Inf, matching
    # the degenerate behavior of the PyTorch reference.
    return sxy_c * jax.lax.rsqrt(sxx_c * syy_c)


class CorrLoss:
    """JAX/Pallas equivalent of the PyTorch CorrLoss module (no parameters)."""

    def __call__(self, yhat, y):
        return corr_loss(yhat, y)


def _numpy_reference(yhat, y):
    yhat = np.asarray(yhat, dtype=np.float64).reshape(-1)
    y = np.asarray(y, dtype=np.float64).reshape(-1)
    idx = ~np.isnan(y)
    x = yhat[idx]
    t = y[idx]
    cx = x - x.mean()
    cy = t - t.mean()
    return (cx * cy).sum() / np.sqrt((cx * cx).sum() * (cy * cy).sum())


if __name__ == "__main__":
    key = jax.random.PRNGKey(0)
    loss_fn = CorrLoss()

    def make_case(key, shape, mean_shift, nan_frac):
        k1, k2, k3 = jax.random.split(key, 3)
        yhat = jax.random.normal(k1, shape, dtype=jnp.float32) + mean_shift
        y = 0.7 * yhat + 0.3 * jax.random.normal(k2, shape, dtype=jnp.float32)
        y = jnp.where(jax.random.uniform(k3, shape) < nan_frac, jnp.nan, y)
        return yhat, y

    k_a, k_b, k_c = jax.random.split(key, 3)
    cases = [
        # (a) small NCHW shape -> single tile, VPU-reduce fallback path.
        make_case(k_a, (2, 4, 16, 16), 0.0, 0.05),
        # (b) larger NCHW shape -> tile_rows multiple of 128, MXU-reduce path.
        make_case(k_b, (2, 8, 64, 64), 0.5, 0.05),
        # (c) ragged 1-D length -> zero-padding + tail index-mask path.
        make_case(k_c, (5000,), 1.0, 0.10),
    ]

    ok = True
    for idx, (yhat, y) in enumerate(cases):
        r = jax.block_until_ready(loss_fn(yhat, y))
        ref = _numpy_reference(np.asarray(yhat), np.asarray(y))
        if not np.isfinite(float(r)) or abs(float(r) - ref) > 5e-4:
            ok = False
            print(f"case {idx}: mismatch kernel={float(r)} ref={ref}")

    assert ok, "kernel/reference mismatch"
    print("KERNEL_OK")
</pallas_src>

<mosaic_0001>
module attributes {stable_mosaic.version = 11 : i64} {
  func.func @_corr_moments_kernel(%arg0: i32, %arg1: i32, %arg2: memref<16x128xf32, #tpu.memory_space<vmem>>, %arg3: memref<16x128xf32, #tpu.memory_space<vmem>>, %arg4: memref<1x6x8x128xf32, #tpu.memory_space<vmem>>) attributes {dimension_semantics = [#tpu.dimension_semantics<parallel>, #tpu.dimension_semantics<arbitrary>], iteration_bounds = array<i64: 1, 1>, scalar_prefetch = 0 : i64, scratch_operands = 0 : i64, tpu.core_type = #tpu.core_type<tc>, window_params = [{transform_indices = @transform_0, window_bounds = array<i64: 16, 128>}, {transform_indices = @transform_1, window_bounds = array<i64: 16, 128>}, {transform_indices = @transform_2, window_bounds = array<i64: 1, 6, 8, 128>}]} {
    %c0_i32 = arith.constant 0 : i32
    %0 = arith.cmpi eq, %arg1, %c0_i32 : i32
    %1 = arith.extui %0 : i1 to i32
    %c0_i32_0 = arith.constant 0 : i32
    %2 = arith.cmpi ne, %1, %c0_i32_0 : i32
    scf.if %2 {
      %cst = arith.constant 0.000000e+00 : f32
      %16 = vector.broadcast %cst : f32 to vector<6x8x128xf32>
      %c0 = arith.constant 0 : index
      %c0_6 = arith.constant 0 : index
      %c0_7 = arith.constant 0 : index
      %c0_8 = arith.constant 0 : index
      %17 = vector.load %arg4[%c0, %c0_6, %c0_7, %c0_8] : memref<1x6x8x128xf32, #tpu.memory_space<vmem>>, vector<1x6x8x128xf32>
      %18 = vector.shape_cast %17 : vector<1x6x8x128xf32> to vector<6x8x128xf32>
      %19 = vector.shape_cast %16 : vector<6x8x128xf32> to vector<1x6x8x128xf32>
      tpu.vector_store %arg4[%c0, %c0_6, %c0_7, %c0_8], %19 {strides = array<i32>} : memref<1x6x8x128xf32, #tpu.memory_space<vmem>>, vector<1x6x8x128xf32>,
    } else {
    }
    %c1_i32 = arith.constant 1 : i32
    %3 = arith.muli %arg0, %c1_i32 : i32
    %4 = arith.addi %3, %arg1 : i32
    %c2048_i32 = arith.constant 2048 : i32
    %5 = arith.muli %4, %c2048_i32 : i32
    %c1_i32_1 = arith.constant 1 : i32
    %6 = arith.cmpi slt, %4, %c1_i32_1 : i32
    %c2048_i32_2 = arith.constant 2048 : i32
    %7 = arith.addi %5, %c2048_i32_2 : i32
    %c2048_i32_3 = arith.constant 2048 : i32
    %8 = arith.cmpi sle, %7, %c2048_i32_3 : i32
    %9 = arith.andi %6, %8 : i1
    %10 = arith.extui %9 : i1 to i32
    %c0_i32_4 = arith.constant 0 : i32
    %11 = arith.cmpi ne, %10, %c0_i32_4 : i32
    scf.if %11 {
      %c0 = arith.constant 0 : index
      %c0_6 = arith.constant 0 : index
      %16 = vector.load %arg2[%c0, %c0_6] : memref<16x128xf32, #tpu.memory_space<vmem>>, vector<16x128xf32>
      %c0_7 = arith.constant 0 : index
      %c0_8 = arith.constant 0 : index
      %17 = vector.load %arg3[%c0_7, %c0_8] : memref<16x128xf32, #tpu.memory_space<vmem>>, vector<16x128xf32>
      %18 = arith.cmpf one, %17, %17 : vector<16x128xf32>
      %cst = arith.constant dense<true> : vector<16x128xi1>
      %19 = arith.xori %18, %cst : vector<16x128xi1>
      %20 = arith.extui %19 : vector<16x128xi1> to vector<16x128xi32>
      %21 = arith.sitofp %20 : vector<16x128xi32> to vector<16x128xf32>
      %cst_9 = arith.constant 0.000000e+00 : f32
      %22 = vector.broadcast %cst_9 : f32 to vector<16x128xf32>
      %23 = arith.select %19, %16, %22 : vector<16x128xi1>, vector<16x128xf32>
      %cst_10 = arith.constant 0.000000e+00 : f32
      %24 = vector.broadcast %cst_10 : f32 to vector<16x128xf32>
      %25 = arith.select %19, %17, %24 : vector<16x128xi1>, vector<16x128xf32>
      %26 = arith.mulf %23, %25 : vector<16x128xf32>
      %27 = arith.mulf %23, %23 : vector<16x128xf32>
      %28 = arith.mulf %25, %25 : vector<16x128xf32>
      %c0_11 = arith.constant 0 : index
      %c0_12 = arith.constant 0 : index
      %c0_13 = arith.constant 0 : index
      %c0_14 = arith.constant 0 : index
      %29 = vector.load %arg4[%c0_11, %c0_12, %c0_13, %c0_14] : memref<1x6x8x128xf32, #tpu.memory_space<vmem>>, vector<1x1x8x128xf32>
      %30 = vector.shape_cast %29 : vector<1x1x8x128xf32> to vector<8x128xf32>
      %31 = vector.shape_cast %21 : vector<16x128xf32> to vector<2x8x128xf32>
      %cst_15 = arith.constant dense<0.000000e+00> : vector<8x128xf32>
      %32 = vector.multi_reduction <add>, %31, %cst_15 [0] : vector<2x8x128xf32> to vector<8x128xf32>
      %33 = arith.addf %30, %32 : vector<8x128xf32>
      %c0_16 = arith.constant 0 : index
      %c0_17 = arith.constant 0 : index
      %c0_18 = arith.constant 0 : index
      %c0_19 = arith.constant 0 : index
      %34 = vector.load %arg4[%c0_16, %c0_17, %c0_18, %c0_19] : memref<1x6x8x128xf32, #tpu.memory_space<vmem>>, vector<1x1x8x128xf32>
      %35 = vector.shape_cast %34 : vector<1x1x8x128xf32> to vector<8x128xf32>
      %36 = vector.shape_cast %33 : vector<8x128xf32> to vector<1x1x8x128xf32>
      tpu.vector_store %arg4[%c0_16, %c0_17, %c0_18, %c0_19], %36 {strides = array<i32>} : memref<1x6x8x128xf32, #tpu.memory_space<vmem>>, vector<1x1x8x128xf32>,
      %c0_20 = arith.constant 0 : index
      %c1 = arith.constant 1 : index
      %c0_21 = arith.constant 0 : index
      %c0_22 = arith.constant 0 : index
      %37 = vector.load %arg4[%c0_20, %c1, %c0_21, %c0_22] : memref<1x6x8x128xf32, #tpu.memory_space<vmem>>, vector<1x1x8x128xf32>
      %38 = vector.shape_cast %37 : vector<1x1x8x128xf32> to vector<8x128xf32>
      %39 = vector.shape_cast %23 : vector<16x128xf32> to vector<2x8x128xf32>
      %cst_23 = arith.constant dense<0.000000e+00> : vector<8x128xf32>
      %40 = vector.multi_reduction <add>, %39, %cst_23 [0] : vector<2x8x128xf32> to vector<8x128xf32>
      %41 = arith.addf %38, %40 : vector<8x128xf32>
      %c0_24 = arith.constant 0 : index
      %c1_25 = arith.constant 1 : index
      %c0_26 = arith.constant 0 : index
      %c0_27 = arith.constant 0 : index
      %42 = vector.load %arg4[%c0_24, %c1_25, %c0_26, %c0_27] : memref<1x6x8x128xf32, #tpu.memory_space<vmem>>, vector<1x1x8x128xf32>
      %43 = vector.shape_cast %42 : vector<1x1x8x128xf32> to vector<8x128xf32>
      %44 = vector.shape_cast %41 : vector<8x128xf32> to vector<1x1x8x128xf32>
      tpu.vector_store %arg4[%c0_24, %c1_25, %c0_26, %c0_27], %44 {strides = array<i32>} : memref<1x6x8x128xf32, #tpu.memory_space<vmem>>, vector<1x1x8x128xf32>,
      %c0_28 = arith.constant 0 : index
      %c2 = arith.constant 2 : index
      %c0_29 = arith.constant 0 : index
      %c0_30 = arith.constant 0 : index
      %45 = vector.load %arg4[%c0_28, %c2, %c0_29, %c0_30] : memref<1x6x8x128xf32, #tpu.memory_space<vmem>>, vector<1x1x8x128xf32>
      %46 = vector.shape_cast %45 : vector<1x1x8x128xf32> to vector<8x128xf32>
      %47 = vector.shape_cast %25 : vector<16x128xf32> to vector<2x8x128xf32>
      %cst_31 = arith.constant dense<0.000000e+00> : vector<8x128xf32>
      %48 = vector.multi_reduction <add>, %47, %cst_31 [0] : vector<2x8x128xf32> to vector<8x128xf32>
      %49 = arith.addf %46, %48 : vector<8x128xf32>
      %c0_32 = arith.constant 0 : index
      %c2_33 = arith.constant 2 : index
      %c0_34 = arith.constant 0 : index
      %c0_35 = arith.constant 0 : index
      %50 = vector.load %arg4[%c0_32, %c2_33, %c0_34, %c0_35] : memref<1x6x8x128xf32, #tpu.memory_space<vmem>>, vector<1x1x8x128xf32>
      %51 = vector.shape_cast %50 : vector<1x1x8x128xf32> to vector<8x128xf32>
      %52 = vector.shape_cast %49 : vector<8x128xf32> to vector<1x1x8x128xf32>
      tpu.vector_store %arg4[%c0_32, %c2_33, %c0_34, %c0_35], %52 {strides = array<i32>} : memref<1x6x8x128xf32, #tpu.memory_space<vmem>>, vector<1x1x8x128xf32>,
      %c0_36 = arith.constant 0 : index
      %c3 = arith.constant 3 : index
      %c0_37 = arith.constant 0 : index
      %c0_38 = arith.constant 0 : index
      %53 = vector.load %arg4[%c0_36, %c3, %c0_37, %c0_38] : memref<1x6x8x128xf32, #tpu.memory_space<vmem>>, vector<1x1x8x128xf32>
      %54 = vector.shape_cast %53 : vector<1x1x8x128xf32> to vector<8x128xf32>
      %55 = vector.shape_cast %26 : vector<16x128xf32> to vector<2x8x128xf32>
      %cst_39 = arith.constant dense<0.000000e+00> : vector<8x128xf32>
      %56 = vector.multi_reduction <add>, %55, %cst_39 [0] : vector<2x8x128xf32> to vector<8x128xf32>
      %57 = arith.addf %54, %56 : vector<8x128xf32>
      %c0_40 = arith.constant 0 : index
      %c3_41 = arith.constant 3 : index
      %c0_42 = arith.constant 0 : index
      %c0_43 = arith.constant 0 : index
      %58 = vector.load %arg4[%c0_40, %c3_41, %c0_42, %c0_43] : memref<1x6x8x128xf32, #tpu.memory_space<vmem>>, vector<1x1x8x128xf32>
      %59 = vector.shape_cast %58 : vector<1x1x8x128xf32> to vector<8x128xf32>
      %60 = vector.shape_cast %57 : vector<8x128xf32> to vector<1x1x8x128xf32>
      tpu.vector_store %arg4[%c0_40, %c3_41, %c0_42, %c0_43], %60 {strides = array<i32>} : memref<1x6x8x128xf32, #tpu.memory_space<vmem>>, vector<1x1x8x128xf32>,
      %c0_44 = arith.constant 0 : index
      %c4 = arith.constant 4 : index
      %c0_45 = arith.constant 0 : index
      %c0_46 = arith.constant 0 : index
      %61 = vector.load %arg4[%c0_44, %c4, %c0_45, %c0_46] : memref<1x6x8x128xf32, #tpu.memory_space<vmem>>, vector<1x1x8x128xf32>
      %62 = vector.shape_cast %61 : vector<1x1x8x128xf32> to vector<8x128xf32>
      %63 = vector.shape_cast %27 : vector<16x128xf32> to vector<2x8x128xf32>
      %cst_47 = arith.constant dense<0.000000e+00> : vector<8x128xf32>
      %64 = vector.multi_reduction <add>, %63, %cst_47 [0] : vector<2x8x128xf32> to vector<8x128xf32>
      %65 = arith.addf %62, %64 : vector<8x128xf32>
      %c0_48 = arith.constant 0 : index
      %c4_49 = arith.constant 4 : index
      %c0_50 = arith.constant 0 : index
      %c0_51 = arith.constant 0 : index
      %66 = vector.load %arg4[%c0_48, %c4_49, %c0_50, %c0_51] : memref<1x6x8x128xf32, #tpu.memory_space<vmem>>, vector<1x1x8x128xf32>
      %67 = vector.shape_cast %66 : vector<1x1x8x128xf32> to vector<8x128xf32>
      %68 = vector.shape_cast %65 : vector<8x128xf32> to vector<1x1x8x128xf32>
      tpu.vector_store %arg4[%c0_48, %c4_49, %c0_50, %c0_51], %68 {strides = array<i32>} : memref<1x6x8x128xf32, #tpu.memory_space<vmem>>, vector<1x1x8x128xf32>,
      %c0_52 = arith.constant 0 : index
      %c5 = arith.constant 5 : index
      %c0_53 = arith.constant 0 : index
      %c0_54 = arith.constant 0 : index
      %69 = vector.load %arg4[%c0_52, %c5, %c0_53, %c0_54] : memref<1x6x8x128xf32, #tpu.memory_space<vmem>>, vector<1x1x8x128xf32>
      %70 = vector.shape_cast %69 : vector<1x1x8x128xf32> to vector<8x128xf32>
      %71 = vector.shape_cast %28 : vector<16x128xf32> to vector<2x8x128xf32>
      %cst_55 = arith.constant dense<0.000000e+00> : vector<8x128xf32>
      %72 = vector.multi_reduction <add>, %71, %cst_55 [0] : vector<2x8x128xf32> to vector<8x128xf32>
      %73 = arith.addf %70, %72 : vector<8x128xf32>
      %c0_56 = arith.constant 0 : index
      %c5_57 = arith.constant 5 : index
      %c0_58 = arith.constant 0 : index
      %c0_59 = arith.constant 0 : index
      %74 = vector.load %arg4[%c0_56, %c5_57, %c0_58, %c0_59] : memref<1x6x8x128xf32, #tpu.memory_space<vmem>>, vector<1x1x8x128xf32>
      %75 = vector.shape_cast %74 : vector<1x1x8x128xf32> to vector<8x128xf32>
      %76 = vector.shape_cast %73 : vector<8x128xf32> to vector<1x1x8x128xf32>
      tpu.vector_store %arg4[%c0_56, %c5_57, %c0_58, %c0_59], %76 {strides = array<i32>} : memref<1x6x8x128xf32, #tpu.memory_space<vmem>>, vector<1x1x8x128xf32>,
    } else {
    }
    %true = arith.constant true
    %12 = arith.xori %8, %true : i1
    %13 = arith.andi %6, %12 : i1
    %14 = arith.extui %13 : i1 to i32
    %c0_i32_5 = arith.constant 0 : i32
    %15 = arith.cmpi ne, %14, %c0_i32_5 : i32
    scf.if %15 {
      %16 = tpu.iota {dimensions = array<i32: 0>} : vector<16x128xi32>
      %17 = tpu.iota {dimensions = array<i32: 1>} : vector<16x128xi32>
      %c128_i32 = arith.constant 128 : i32
      %18 = vector.broadcast %c128_i32 : i32 to vector<16x128xi32>
      %19 = arith.muli %16, %18 : vector<16x128xi32>
      %20 = arith.addi %19, %17 : vector<16x128xi32>
      %c2048_i32_6 = arith.constant 2048 : i32
      %21 = arith.subi %c2048_i32_6, %5 : i32
      %22 = vector.broadcast %21 : i32 to vector<16x128xi32>
      %23 = arith.cmpi slt, %20, %22 : vector<16x128xi32>
      %c0 = arith.constant 0 : index
      %c0_7 = arith.constant 0 : index
      %24 = vector.load %arg2[%c0, %c0_7] : memref<16x128xf32, #tpu.memory_space<vmem>>, vector<16x128xf32>
      %c0_8 = arith.constant 0 : index
      %c0_9 = arith.constant 0 : index
      %25 = vector.load %arg3[%c0_8, %c0_9] : memref<16x128xf32, #tpu.memory_space<vmem>>, vector<16x128xf32>
      %26 = arith.cmpf one, %25, %25 : vector<16x128xf32>
      %cst = arith.constant dense<true> : vector<16x128xi1>
      %27 = arith.xori %26, %cst : vector<16x128xi1>
      %28 = arith.andi %27, %23 : vector<16x128xi1>
      %29 = arith.extui %28 : vector<16x128xi1> to vector<16x128xi32>
      %30 = arith.sitofp %29 : vector<16x128xi32> to vector<16x128xf32>
      %cst_10 = arith.constant 0.000000e+00 : f32
      %31 = vector.broadcast %cst_10 : f32 to vector<16x128xf32>
      %32 = arith.select %28, %24, %31 : vector<16x128xi1>, vector<16x128xf32>
      %cst_11 = arith.constant 0.000000e+00 : f32
      %33 = vector.broadcast %cst_11 : f32 to vector<16x128xf32>
      %34 = arith.select %28, %25, %33 : vector<16x128xi1>, vector<16x128xf32>
      %35 = arith.mulf %32, %34 : vector<16x128xf32>
      %36 = arith.mulf %32, %32 : vector<16x128xf32>
      %37 = arith.mulf %34, %34 : vector<16x128xf32>
      %c0_12 = arith.constant 0 : index
      %c0_13 = arith.constant 0 : index
      %c0_14 = arith.constant 0 : index
      %c0_15 = arith.constant 0 : index
      %38 = vector.load %arg4[%c0_12, %c0_13, %c0_14, %c0_15] : memref<1x6x8x128xf32, #tpu.memory_space<vmem>>, vector<1x1x8x128xf32>
      %39 = vector.shape_cast %38 : vector<1x1x8x128xf32> to vector<8x128xf32>
      %40 = vector.shape_cast %30 : vector<16x128xf32> to vector<2x8x128xf32>
      %cst_16 = arith.constant dense<0.000000e+00> : vector<8x128xf32>
      %41 = vector.multi_reduction <add>, %40, %cst_16 [0] : vector<2x8x128xf32> to vector<8x128xf32>
      %42 = arith.addf %39, %41 : vector<8x128xf32>
      %c0_17 = arith.constant 0 : index
      %c0_18 = arith.constant 0 : index
      %c0_19 = arith.constant 0 : index
      %c0_20 = arith.constant 0 : index
      %43 = vector.load %arg4[%c0_17, %c0_18, %c0_19, %c0_20] : memref<1x6x8x128xf32, #tpu.memory_space<vmem>>, vector<1x1x8x128xf32>
      %44 = vector.shape_cast %43 : vector<1x1x8x128xf32> to vector<8x128xf32>
      %45 = vector.shape_cast %42 : vector<8x128xf32> to vector<1x1x8x128xf32>
      tpu.vector_store %arg4[%c0_17, %c0_18, %c0_19, %c0_20], %45 {strides = array<i32>} : memref<1x6x8x128xf32, #tpu.memory_space<vmem>>, vector<1x1x8x128xf32>,
      %c0_21 = arith.constant 0 : index
      %c1 = arith.constant 1 : index
      %c0_22 = arith.constant 0 : index
      %c0_23 = arith.constant 0 : index
      %46 = vector.load %arg4[%c0_21, %c1, %c0_22, %c0_23] : memref<1x6x8x128xf32, #tpu.memory_space<vmem>>, vector<1x1x8x128xf32>
      %47 = vector.shape_cast %46 : vector<1x1x8x128xf32> to vector<8x128xf32>
      %48 = vector.shape_cast %32 : vector<16x128xf32> to vector<2x8x128xf32>
      %cst_24 = arith.constant dense<0.000000e+00> : vector<8x128xf32>
      %49 = vector.multi_reduction <add>, %48, %cst_24 [0] : vector<2x8x128xf32> to vector<8x128xf32>
      %50 = arith.addf %47, %49 : vector<8x128xf32>
      %c0_25 = arith.constant 0 : index
      %c1_26 = arith.constant 1 : index
      %c0_27 = arith.constant 0 : index
      %c0_28 = arith.constant 0 : index
      %51 = vector.load %arg4[%c0_25, %c1_26, %c0_27, %c0_28] : memref<1x6x8x128xf32, #tpu.memory_space<vmem>>, vector<1x1x8x128xf32>
      %52 = vector.shape_cast %51 : vector<1x1x8x128xf32> to vector<8x128xf32>
      %53 = vector.shape_cast %50 : vector<8x128xf32> to vector<1x1x8x128xf32>
      tpu.vector_store %arg4[%c0_25, %c1_26, %c0_27, %c0_28], %53 {strides = array<i32>} : memref<1x6x8x128xf32, #tpu.memory_space<vmem>>, vector<1x1x8x128xf32>,
      %c0_29 = arith.constant 0 : index
      %c2 = arith.constant 2 : index
      %c0_30 = arith.constant 0 : index
      %c0_31 = arith.constant 0 : index
      %54 = vector.load %arg4[%c0_29, %c2, %c0_30, %c0_31] : memref<1x6x8x128xf32, #tpu.memory_space<vmem>>, vector<1x1x8x128xf32>
      %55 = vector.shape_cast %54 : vector<1x1x8x128xf32> to vector<8x128xf32>
      %56 = vector.shape_cast %34 : vector<16x128xf32> to vector<2x8x128xf32>
      %cst_32 = arith.constant dense<0.000000e+00> : vector<8x128xf32>
      %57 = vector.multi_reduction <add>, %56, %cst_32 [0] : vector<2x8x128xf32> to vector<8x128xf32>
      %58 = arith.addf %55, %57 : vector<8x128xf32>
      %c0_33 = arith.constant 0 : index
      %c2_34 = arith.constant 2 : index
      %c0_35 = arith.constant 0 : index
      %c0_36 = arith.constant 0 : index
      %59 = vector.load %arg4[%c0_33, %c2_34, %c0_35, %c0_36] : memref<1x6x8x128xf32, #tpu.memory_space<vmem>>, vector<1x1x8x128xf32>
      %60 = vector.shape_cast %59 : vector<1x1x8x128xf32> to vector<8x128xf32>
      %61 = vector.shape_cast %58 : vector<8x128xf32> to vector<1x1x8x128xf32>
      tpu.vector_store %arg4[%c0_33, %c2_34, %c0_35, %c0_36], %61 {strides = array<i32>} : memref<1x6x8x128xf32, #tpu.memory_space<vmem>>, vector<1x1x8x128xf32>,
      %c0_37 = arith.constant 0 : index
      %c3 = arith.constant 3 : index
      %c0_38 = arith.constant 0 : index
      %c0_39 = arith.constant 0 : index
      %62 = vector.load %arg4[%c0_37, %c3, %c0_38, %c0_39] : memref<1x6x8x128xf32, #tpu.memory_space<vmem>>, vector<1x1x8x128xf32>
      %63 = vector.shape_cast %62 : vector<1x1x8x128xf32> to vector<8x128xf32>
      %64 = vector.shape_cast %35 : vector<16x128xf32> to vector<2x8x128xf32>
      %cst_40 = arith.constant dense<0.000000e+00> : vector<8x128xf32>
      %65 = vector.multi_reduction <add>, %64, %cst_40 [0] : vector<2x8x128xf32> to vector<8x128xf32>
      %66 = arith.addf %63, %65 : vector<8x128xf32>
      %c0_41 = arith.constant 0 : index
      %c3_42 = arith.constant 3 : index
      %c0_43 = arith.constant 0 : index
      %c0_44 = arith.constant 0 : index
      %67 = vector.load %arg4[%c0_41, %c3_42, %c0_43, %c0_44] : memref<1x6x8x128xf32, #tpu.memory_space<vmem>>, vector<1x1x8x128xf32>
      %68 = vector.shape_cast %67 : vector<1x1x8x128xf32> to vector<8x128xf32>
      %69 = vector.shape_cast %66 : vector<8x128xf32> to vector<1x1x8x128xf32>
      tpu.vector_store %arg4[%c0_41, %c3_42, %c0_43, %c0_44], %69 {strides = array<i32>} : memref<1x6x8x128xf32, #tpu.memory_space<vmem>>, vector<1x1x8x128xf32>,
      %c0_45 = arith.constant 0 : index
      %c4 = arith.constant 4 : index
      %c0_46 = arith.constant 0 : index
      %c0_47 = arith.constant 0 : index
      %70 = vector.load %arg4[%c0_45, %c4, %c0_46, %c0_47] : memref<1x6x8x128xf32, #tpu.memory_space<vmem>>, vector<1x1x8x128xf32>
      %71 = vector.shape_cast %70 : vector<1x1x8x128xf32> to vector<8x128xf32>
      %72 = vector.shape_cast %36 : vector<16x128xf32> to vector<2x8x128xf32>
      %cst_48 = arith.constant dense<0.000000e+00> : vector<8x128xf32>
      %73 = vector.multi_reduction <add>, %72, %cst_48 [0] : vector<2x8x128xf32> to vector<8x128xf32>
      %74 = arith.addf %71, %73 : vector<8x128xf32>
      %c0_49 = arith.constant 0 : index
      %c4_50 = arith.constant 4 : index
      %c0_51 = arith.constant 0 : index
      %c0_52 = arith.constant 0 : index
      %75 = vector.load %arg4[%c0_49, %c4_50, %c0_51, %c0_52] : memref<1x6x8x128xf32, #tpu.memory_space<vmem>>, vector<1x1x8x128xf32>
      %76 = vector.shape_cast %75 : vector<1x1x8x128xf32> to vector<8x128xf32>
      %77 = vector.shape_cast %74 : vector<8x128xf32> to vector<1x1x8x128xf32>
      tpu.vector_store %arg4[%c0_49, %c4_50, %c0_51, %c0_52], %77 {strides = array<i32>} : memref<1x6x8x128xf32, #tpu.memory_space<vmem>>, vector<1x1x8x128xf32>,
      %c0_53 = arith.constant 0 : index
      %c5 = arith.constant 5 : index
      %c0_54 = arith.constant 0 : index
      %c0_55 = arith.constant 0 : index
      %78 = vector.load %arg4[%c0_53, %c5, %c0_54, %c0_55] : memref<1x6x8x128xf32, #tpu.memory_space<vmem>>, vector<1x1x8x128xf32>
      %79 = vector.shape_cast %78 : vector<1x1x8x128xf32> to vector<8x128xf32>
      %80 = vector.shape_cast %37 : vector<16x128xf32> to vector<2x8x128xf32>
      %cst_56 = arith.constant dense<0.000000e+00> : vector<8x128xf32>
      %81 = vector.multi_reduction <add>, %80, %cst_56 [0] : vector<2x8x128xf32> to vector<8x128xf32>
      %82 = arith.addf %79, %81 : vector<8x128xf32>
      %c0_57 = arith.constant 0 : index
      %c5_58 = arith.constant 5 : index
      %c0_59 = arith.constant 0 : index
      %c0_60 = arith.constant 0 : index
      %83 = vector.load %arg4[%c0_57, %c5_58, %c0_59, %c0_60] : memref<1x6x8x128xf32, #tpu.memory_space<vmem>>, vector<1x1x8x128xf32>
      %84 = vector.shape_cast %83 : vector<1x1x8x128xf32> to vector<8x128xf32>
      %85 = vector.shape_cast %82 : vector<8x128xf32> to vector<1x1x8x128xf32>
      tpu.vector_store %arg4[%c0_57, %c5_58, %c0_59, %c0_60], %85 {strides = array<i32>} : memref<1x6x8x128xf32, #tpu.memory_space<vmem>>, vector<1x1x8x128xf32>,
    } else {
    }
    return
  }
  func.func @transform_0(%arg0: i32, %arg1: i32) -> (i32, i32) {
    %c1_i32 = arith.constant 1 : i32
    %0 = arith.muli %arg0, %c1_i32 : i32
    %1 = arith.addi %0, %arg1 : i32
    %c0_i32 = arith.constant 0 : i32
    %2 = arith.minsi %1, %c0_i32 : i32
    %c0_i32_0 = arith.constant 0 : i32
    %c0_i32_1 = arith.constant 0 : i32
    return %2, %c0_i32_0 : i32, i32
  }
  func.func @transform_1(%arg0: i32, %arg1: i32) -> (i32, i32) {
    %c1_i32 = arith.constant 1 : i32
    %0 = arith.muli %arg0, %c1_i32 : i32
    %1 = arith.addi %0, %arg1 : i32
    %c0_i32 = arith.constant 0 : i32
    %2 = arith.minsi %1, %c0_i32 : i32
    %c0_i32_0 = arith.constant 0 : i32
    %c0_i32_1 = arith.constant 0 : i32
    return %2, %c0_i32_0 : i32, i32
  }
  func.func @transform_2(%arg0: i32, %arg1: i32) -> (i32, i32, i32, i32) {
    %c0_i32 = arith.constant 0 : i32
    %c0_i32_0 = arith.constant 0 : i32
    %c0_i32_1 = arith.constant 0 : i32
    %c0_i32_2 = arith.constant 0 : i32
    return %arg0, %c0_i32, %c0_i32_0, %c0_i32_1 : i32, i32, i32, i32
  }
}

</mosaic_0001>

<llo_original>
// kernel: tpu_custom_call.1
$region0: #{tpu_custom_call.1}
  #allocation0 [shape = 'u32[]', space=smem, size = 0x4, offset = 0x4, fixed_abs, tag = 'smem constant byte address 0x4 - core index']
  #allocation1 [shape = 'u32[72,128]{1,0:T(1,128)}', space=vmem, size = 0x9000, scoped, tag = 'internal scratch']
  %s0 = inlined_call_operand.hbm [shape: f32[16,128], index: 0, kind: input, shape index: {}]
  %s1 = inlined_call_operand.hbm [shape: f32[16,128], index: 1, kind: input, shape index: {}]
  %s2 = inlined_call_operand.hbm [shape: f32[1,6,8,128], index: 2, kind: output, shape index: {}]
  %s3 = sld [smem:[#allocation0]]
  $region38: #{tpu_custom_call.1} parent=0
    _
  %s5 = ssub.s32 1, %s3
  %s6 = scalar_select 0, %s5, %s3
  $region1: #{tpu_custom_call.1} parent=0
    #allocation2 [shape = 'u8[8192]{0}', space=vmem, size = 0x2000, scoped, tag = 'input window, operand 0, single buffered']
    #allocation3 [shape = 's32[1]{0}', space=sflag, size = 0x4, scoped, tag = 'scoped memory for tpu_custom_call.1']
    #allocation4 [shape = 's32[1]{0}', space=sflag, size = 0x4, scoped, tag = 'scoped memory for tpu_custom_call.1']
    #allocation5 [shape = 'u8[8192]{0}', space=vmem, size = 0x2000, scoped, tag = 'input window, operand 1, single buffered']
    #allocation6 [shape = 's32[1]{0}', space=sflag, size = 0x4, scoped, tag = 'scoped memory for tpu_custom_call.1']
    #allocation7 [shape = 'u8[24576]{0}', space=vmem, size = 0x6000, scoped, tag = 'output window, operand 0, single buffered']
    %7 = vsyncpa [#allocation3], 0
    %8 = vsyncpa [#allocation6], 0
    %9 = vsyncpa [#allocation4], 0
    // Predicated region
    $region2: #{tpu_custom_call.1} parent=1 // pred_check
      _
    $region3: #{tpu_custom_call.1} parent=1 // pred_check_branch
      %11 = sbr.rel (0) target = $region5
    $region4: #{tpu_custom_call.1} parent=1 // pred_region
      %s12 = sadd.s32 0, 0
      %p13 = scmp.lt.s32.totalorder %s12, 0
      %s14 = scalar_select %p13, %s12, 0
      %s15 = smul.u32 2, %s14
      %17 = vsyncadd [#allocation3], 0
      %s18 = smul.addr %s15, 8
      %s19 = scalar_lea.hbm %s0, %s18
      %s20 = sshll.u32 %s19, 4
      %s21 = int_to_ptr.hbm [resolvable:$true] %s20
      %s22 = sshll.u32 [#allocation2], 4
      %s23 = int_to_ptr.vmem [resolvable:$true] %s22
      %28 = dma.hbm_to_vmem [thread:$0]  %s21, 256, %s23, [#allocation3], 128, 128, 8
    $region5: #{tpu_custom_call.1} parent=1 // pred_fallthru
      _
    // Predicated region
    $region6: #{tpu_custom_call.1} parent=1 // pred_check
      _
    $region7: #{tpu_custom_call.1} parent=1 // pred_check_branch
      %30 = sbr.rel (0) target = $region9
    $region8: #{tpu_custom_call.1} parent=1 // pred_region
      %s31 = sadd.s32 0, 0
      %p32 = scmp.lt.s32.totalorder %s31, 0
      %s33 = scalar_select %p32, %s31, 0
      %s34 = smul.u32 2, %s33
      %36 = vsyncadd [#allocation6], 0
      %s37 = smul.addr %s34, 8
      %s38 = scalar_lea.hbm %s1, %s37
      %s39 = sshll.u32 %s38, 4
      %s40 = int_to_ptr.hbm [resolvable:$true] %s39
      %s41 = sshll.u32 [#allocation5], 4
      %s42 = int_to_ptr.vmem [resolvable:$true] %s41
      %47 = dma.hbm_to_vmem [thread:$0]  %s40, 256, %s42, [#allocation6], 128, 128, 8
    $region9: #{tpu_custom_call.1} parent=1 // pred_fallthru
      _
    // Predicated region
    $region10: #{tpu_custom_call.1} parent=1 // pred_check
      _
    $region11: #{tpu_custom_call.1} parent=1 // pred_check_branch
      %49 = sbr.rel (0) target = $region13
    $region12: #{tpu_custom_call.1} parent=1 // pred_region
      %51 = dma.done [#allocation3], 256
    $region13: #{tpu_custom_call.1} parent=1 // pred_fallthru
      _
    // Predicated region
    $region14: #{tpu_custom_call.1} parent=1 // pred_check
      _
    $region15: #{tpu_custom_call.1} parent=1 // pred_check_branch
      %53 = sbr.rel (0) target = $region17
    $region16: #{tpu_custom_call.1} parent=1 // pred_region
      %55 = dma.done [#allocation6], 256
    $region17: #{tpu_custom_call.1} parent=1 // pred_fallthru
      _
    %s56 = sadd.s32 0, 0
    %p57 = scmp.lt.s32.totalorder %s56, 0
    %s58 = scalar_select %p57, %s56, 0
    %s59 = smul.u32 2, %s58
    %s60 = sadd.s32 0, 0
    %p61 = scmp.lt.s32.totalorder %s60, 0
    %s62 = scalar_select %p61, %s60, 0
    %s63 = smul.u32 2, %s62
    %p64 = scmp.eq.s32.totalorder 0, 0
    // Predicated region
    $region18: #{tpu_custom_call.1} parent=1 // pred_check
      %p65 = pneg %p64
    $region19: #{tpu_custom_call.1} parent=1 // pred_check_branch
      %67 = sbr.rel (%p65) target = $region21
    $region20: #{tpu_custom_call.1} parent=1 // pred_region
      %68 = vst [vmem:[#allocation7] sm:$0xff] 0.0
      %69 = vst [vmem:[#allocation7 + $0x8] sm:$0xff] 0.0
      %70 = vst [vmem:[#allocation7 + $0x10] sm:$0xff] 0.0
      %71 = vst [vmem:[#allocation7 + $0x18] sm:$0xff] 0.0
      %72 = vst [vmem:[#allocation7 + $0x20] sm:$0xff] 0.0
      %73 = vst [vmem:[#allocation7 + $0x28] sm:$0xff] 0.0
    $region21: #{tpu_custom_call.1} parent=1 // pred_fallthru
      _
    %s74 = sadd.s32 0, 0
    %s75 = smul.u32 %s74, 2048
    %p76 = scmp.lt.s32.totalorder %s74, 1
    %s77 = sadd.s32 %s75, 2048
    %p78 = scmp.le.s32.totalorder %s77, 2048
    %p79 = pnand %p76, %p78
    %p80 = pneg %p79
    // Predicated region
    $region22: #{tpu_custom_call.1} parent=1 // pred_check
      _
    $region23: #{tpu_custom_call.1} parent=1 // pred_check_branch
      %82 = sbr.rel (%p79) target = $region25
    $region24: #{tpu_custom_call.1} parent=1 // pred_region
      %v83 = vld [vmem:[#allocation2] sm:$0xff]
      %v84 = vld [vmem:[#allocation2 + $0x8] sm:$0xff]
      %v85 = vld [vmem:[#allocation5] sm:$0xff]
      %v86 = vld [vmem:[#allocation5 + $0x8] sm:$0xff]
      %vm87 = vcmp.ne.f32.partialorder %v85, %v85
      %vm88 = vcmp.ne.f32.partialorder %v86, %v86
      %vm89 = vmxor %vm87, 1
      %vm90 = vmxor %vm88, 1
      %v91 = vsel %vm89, 1, 0
      %v92 = vsel %vm90, 1, 0
      %v93 = vcvt.s32.f32 %v91
      %v94 = vcvt.s32.f32 %v92
      %v95 = vsel %vm89, %v83, 0.0
      %v96 = vsel %vm90, %v84, 0.0
      %v97 = vsel %vm89, %v85, 0.0
      %v98 = vsel %vm90, %v86, 0.0
      %v99 = vmul.f32 %v95, %v97
      %v100 = vmul.f32 %v96, %v98
      %v101 = vmul.f32 %v95, %v95
      %v102 = vmul.f32 %v96, %v96
      %v103 = vmul.f32 %v97, %v97
      %v104 = vmul.f32 %v98, %v98
      %v105 = vld [vmem:[#allocation7] sm:$0xff]
      %v106 = vadd.f32 %v93, %v94
      %v107 = vadd.f32 %v105, %v106
      %108 = vst [vmem:[#allocation7] sm:$0xff] %v107
      %s109 = scalar_lea.vmem [#allocation7], 8
      %v110 = vld [vmem:[%s109] sm:$0xff]
      %v111 = vadd.f32 %v95, %v96
      %v112 = vadd.f32 %v110, %v111
      %113 = vst [vmem:[%s109] sm:$0xff] %v112
      %s114 = scalar_lea.vmem [#allocation7], 16
      %v115 = vld [vmem:[%s114] sm:$0xff]
      %v116 = vadd.f32 %v97, %v98
      %v117 = vadd.f32 %v115, %v116
      %118 = vst [vmem:[%s114] sm:$0xff] %v117
      %s119 = scalar_lea.vmem [#allocation7], 24
      %v120 = vld [vmem:[%s119] sm:$0xff]
      %v121 = vadd.f32 %v99, %v100
      %v122 = vadd.f32 %v120, %v121
      %123 = vst [vmem:[%s119] sm:$0xff] %v122
      %s124 = scalar_lea.vmem [#allocation7], 32
      %v125 = vld [vmem:[%s124] sm:$0xff]
      %v126 = vadd.f32 %v101, %v102
      %v127 = vadd.f32 %v125, %v126
      %128 = vst [vmem:[%s124] sm:$0xff] %v127
      %s129 = scalar_lea.vmem [#allocation7], 40
      %v130 = vld [vmem:[%s129] sm:$0xff]
      %v131 = vadd.f32 %v103, %v104
      %v132 = vadd.f32 %v130, %v131
      %133 = vst [vmem:[%s129] sm:$0xff] %v132
    $region25: #{tpu_custom_call.1} parent=1 // pred_fallthru
      _
    %p134 = scmp.gt.s32.totalorder %s77, 2048
    %p135 = pnand %p76, %p134
    %p136 = pneg %p135
    // Predicated region
    $region26: #{tpu_custom_call.1} parent=1 // pred_check
      _
    $region27: #{tpu_custom_call.1} parent=1 // pred_check_branch
      %138 = sbr.rel (%p135) target = $region29
    $region28: #{tpu_custom_call.1} parent=1 // pred_region
      %v139 = vlaneseq
      %v140 = vshrl.u32 %v139, 7
      %v141 = vadd.s32 %v140, 8
      %v142 = vlaneseq
      %v143 = vand.u32 %v142, 127
      %v144 = vmul.u32 %v140, 128
      %v145 = vmul.u32 %v141, 128
      %v146 = vadd.s32 %v144, %v143
      %v147 = vadd.s32 %v145, %v143
      %s148 = ssub.s32 2048, %s75
      %v149 = vstv %s148
      %vm150 = vcmp.lt.s32.totalorder %v146, %v149
      %vm151 = vcmp.lt.s32.totalorder %v147, %v149
      %v152 = vld [vmem:[#allocation2] sm:$0xff]
      %v153 = vld [vmem:[#allocation2 + $0x8] sm:$0xff]
      %v154 = vld [vmem:[#allocation5] sm:$0xff]
      %v155 = vld [vmem:[#allocation5 + $0x8] sm:$0xff]
      %vm156 = vcmp.ne.f32.partialorder %v154, %v154
      %vm157 = vcmp.ne.f32.partialorder %v155, %v155
      %vm158 = vmxor %vm156, 1
      %vm159 = vmxor %vm157, 1
      %vm160 = vmand %vm158, %vm150
      %vm161 = vmand %vm159, %vm151
      %v162 = vsel %vm160, 1, 0
      %v163 = vsel %vm161, 1, 0
      %v164 = vcvt.s32.f32 %v162
      %v165 = vcvt.s32.f32 %v163
      %v166 = vsel %vm160, %v152, 0.0
      %v167 = vsel %vm161, %v153, 0.0
      %v168 = vsel %vm160, %v154, 0.0
      %v169 = vsel %vm161, %v155, 0.0
      %v170 = vmul.f32 %v166, %v168
      %v171 = vmul.f32 %v167, %v169
      %v172 = vmul.f32 %v166, %v166
      %v173 = vmul.f32 %v167, %v167
      %v174 = vmul.f32 %v168, %v168
      %v175 = vmul.f32 %v169, %v169
      %v176 = vld [vmem:[#allocation7] sm:$0xff]
      %v177 = vadd.f32 %v164, %v165
      %v178 = vadd.f32 %v176, %v177
      %179 = vst [vmem:[#allocation7] sm:$0xff] %v178
      %s180 = scalar_lea.vmem [#allocation7], 8
      %v181 = vld [vmem:[%s180] sm:$0xff]
      %v182 = vadd.f32 %v166, %v167
      %v183 = vadd.f32 %v181, %v182
      %184 = vst [vmem:[%s180] sm:$0xff] %v183
      %s185 = scalar_lea.vmem [#allocation7], 16
      %v186 = vld [vmem:[%s185] sm:$0xff]
      %v187 = vadd.f32 %v168, %v169
      %v188 = vadd.f32 %v186, %v187
      %189 = vst [vmem:[%s185] sm:$0xff] %v188
      %s190 = scalar_lea.vmem [#allocation7], 24
      %v191 = vld [vmem:[%s190] sm:$0xff]
      %v192 = vadd.f32 %v170, %v171
      %v193 = vadd.f32 %v191, %v192
      %194 = vst [vmem:[%s190] sm:$0xff] %v193
      %s195 = scalar_lea.vmem [#allocation7], 32
      %v196 = vld [vmem:[%s195] sm:$0xff]
      %v197 = vadd.f32 %v172, %v173
      %v198 = vadd.f32 %v196, %v197
      %199 = vst [vmem:[%s195] sm:$0xff] %v198
      %s200 = scalar_lea.vmem [#allocation7], 40
      %v201 = vld [vmem:[%s200] sm:$0xff]
      %v202 = vadd.f32 %v174, %v175
      %v203 = vadd.f32 %v201, %v202
      %204 = vst [vmem:[%s200] sm:$0xff] %v203
    $region29: #{tpu_custom_call.1} parent=1 // pred_fallthru
      _
    // Predicated region
    $region30: #{tpu_custom_call.1} parent=1 // pred_check
      _
    $region31: #{tpu_custom_call.1} parent=1 // pred_check_branch
      %206 = sbr.rel (0) target = $region33
    $region32: #{tpu_custom_call.1} parent=1 // pred_region
      %208 = vsyncadd [#allocation4], 0
      %s209 = sshll.u32 [#allocation7], 4
      %s210 = int_to_ptr.vmem [resolvable:$true] %s209
      %s211 = sshll.u32 %s2, 4
      %s212 = int_to_ptr.hbm [resolvable:$true] %s211
      %217 = dma.vmem_to_hbm [thread:$0]  %s210, 768, %s212, [#allocation4], 128, 128, 8
    $region33: #{tpu_custom_call.1} parent=1 // pred_fallthru
      _
    // Predicated region
    $region34: #{tpu_custom_call.1} parent=1 // pred_check
      _
    $region35: #{tpu_custom_call.1} parent=1 // pred_check_branch
      %219 = sbr.rel (0) target = $region37
    $region36: #{tpu_custom_call.1} parent=1 // pred_region
      %221 = dma.done [#allocation4], 768
    $region37: #{tpu_custom_call.1} parent=1 // pred_fallthru
      _
    %222 = vsyncpa [#allocation3], 1
    %223 = vsyncpa [#allocation6], 1
    %224 = vsyncpa [#allocation4], 1

</llo_original>
